<compile_context>
chip_gen: v7x
topology: tpu7x:2x2x1
jax: 0.10.0
libtpu: 0.0.40
codegen_flags: <defaults>
</compile_context>

<pallas_src>
import functools

import jax
import jax.numpy as jnp
from jax.experimental import pallas as pl
from jax.experimental.pallas import tpu as pltpu

LANE = 128            # TPU lane width: every feature dim is padded to this.
SUBLANE = 8           # batch is padded to a multiple of this (f32 sublane).
MAX_BATCH_BLOCK = 128  # rows per grid step once the batch grows past toy size.

_SQRT_2_OVER_PI = 0.7978845608028654   # hoisted constants (Python floats)
_GELU_C2 = 0.044715 * _SQRT_2_OVER_PI


def _gelu_tanh(v):
    # Tanh-approximate GELU (matches the book's custom GELU module).
    # u = sqrt(2/pi) * (v + 0.044715 v^3) written FMA-style; tanh -> EUP slot.
    u = v * (_SQRT_2_OVER_PI + _GELU_C2 * (v * v))
    return 0.5 * v * (1.0 + jnp.tanh(u))


def elementwise_dtype():
    """bf16 VPU/EUP path on v6e/v7x; keep f32 on v5e (no bf16 VALU/EUP)."""
    dev = jax.devices()[0]
    if dev.platform == "tpu":
        kind = dev.device_kind.lower()
        if "v6" in kind or "v7" in kind:
            return jnp.bfloat16
    return jnp.float32


def mlp_kernel(use_shortcut, layer_sizes, ew_dtype, x_ref, w_ref, b_ref, o_ref):
    """One [BM,128] batch tile through all 5 Linear+GELU layers (weights resident).

    x_ref: [BM, 128]      bf16  (padded activation tile; feeds the MXU directly)
    w_ref: [L, 128, 128]  bf16  (padded, stacked weights; y = x @ W)
    b_ref: [L, 1, 128]    ew    (padded, stacked biases; ew = bf16 on v6e/v7x)
    o_ref: [BM, 128]      f32   (padded output tile, lane-dense store)
    """
    n_layers = len(layer_sizes) - 1
    h = x_ref[...]  # bf16 — no cast before the first matmul
    for i in range(n_layers):
        y = jnp.dot(h.astype(jnp.bfloat16), w_ref[i],
                    preferred_element_type=jnp.float32)
        # Bias add + GELU on the VPU/EUP in ew_dtype (bf16 on v6e/v7x, f32 on v5e).
        y = _gelu_tanh(y.astype(ew_dtype) + b_ref[i])
        # Shortcut is gated on the *logical* (unpadded) layer shapes, matching
        # the PyTorch `x.shape == layer_output.shape` check.
        if use_shortcut and layer_sizes[i] == layer_sizes[i + 1]:
            h = h.astype(jnp.float32) + y.astype(jnp.float32)  # residual in f32
        else:
            h = y
    # TODO(synk): on v5e, if bundle dumps show layer-(i+1)'s weight push
    # serialized behind layer-i's tanh, drive the MXU explicitly with
    # matmul_push_rhs / matmul_acc_lhs / matmul_pop to overlap push with GELU.
    o_ref[...] = h.astype(o_ref.dtype)


def pack_params(weights, biases, *, ew_dtype):
    """Zero-pad to 128 lanes and stack. Call ONCE, outside the per-forward path."""
    w_stack = jnp.stack(
        [jnp.pad(w, ((0, LANE - w.shape[0]), (0, LANE - w.shape[1])))
         for w in weights]
    ).astype(jnp.bfloat16)
    b_stack = jnp.stack(
        [jnp.pad(b.reshape(1, -1), ((0, 0), (0, LANE - b.size))) for b in biases]
    ).astype(ew_dtype)
    return w_stack, b_stack


@functools.partial(jax.jit,
                   static_argnames=("layer_sizes", "use_shortcut", "ew_dtype"))
def example_deep_nn_forward(x, w_stack, b_stack, *, layer_sizes, use_shortcut,
                            ew_dtype):
    """x: [B, layer_sizes[0]] f32; w_stack/b_stack from pack_params()."""
    batch, in_dim = x.shape
    n_layers = len(layer_sizes) - 1
    out_dim = layer_sizes[-1]

    # Only the activation is padded per call (sublane-aligned batch, 128-lane
    # features); weights/biases were packed once outside the hot path.
    if batch >= MAX_BATCH_BLOCK:
        bm = MAX_BATCH_BLOCK
        padded_b = pl.cdiv(batch, bm) * bm
    else:
        padded_b = max(SUBLANE, ((batch + SUBLANE - 1) // SUBLANE) * SUBLANE)
        bm = padded_b
    x_pad = jnp.zeros((padded_b, LANE), jnp.bfloat16)
    x_pad = x_pad.at[:batch, :in_dim].set(x.astype(jnp.bfloat16))

    kernel = functools.partial(mlp_kernel, use_shortcut, layer_sizes, ew_dtype)
    out_pad = pl.pallas_call(
        kernel,
        out_shape=jax.ShapeDtypeStruct((padded_b, LANE), jnp.float32),
        grid=(padded_b // bm,),
        in_specs=[
            pl.BlockSpec((bm, LANE), lambda i: (i, 0)),
            # Weights/biases keep block index (0,0,0) => stay VMEM-resident
            # across the (parallel) batch grid axis.
            pl.BlockSpec((n_layers, LANE, LANE), lambda i: (0, 0, 0)),
            pl.BlockSpec((n_layers, 1, LANE), lambda i: (0, 0, 0)),
        ],
        out_specs=pl.BlockSpec((bm, LANE), lambda i: (i, 0)),
        compiler_params=pltpu.CompilerParams(dimension_semantics=("parallel",)),
    )(x_pad, w_stack, b_stack)

    # Slice padded rows/lanes back off (fused inside this jit).
    return out_pad[:batch, :out_dim]


def init_params(key, layer_sizes):
    """Deterministic Linear params: W[i] has shape [in, out], b[i] is [1, out]."""
    weights, biases = [], []
    for i in range(len(layer_sizes) - 1):
        key, kw, kb = jax.random.split(key, 3)
        fan_in, fan_out = layer_sizes[i], layer_sizes[i + 1]
        bound = 1.0 / jnp.sqrt(fan_in)
        w = jax.random.uniform(kw, (fan_in, fan_out), jnp.float32, -bound, bound)
        b = jax.random.uniform(kb, (1, fan_out), jnp.float32, -bound, bound)
        weights.append(w)
        biases.append(b)
    return weights, biases


def reference_forward(x, weights, biases, *, use_shortcut):
    """Pure-JAX f32 reference mirroring the PyTorch forward."""
    for w, b in zip(weights, biases):
        y = _gelu_tanh(x @ w + b)
        if use_shortcut and x.shape == y.shape:
            x = x + y
        else:
            x = y
    return x


if __name__ == "__main__":
    # 6 layer sizes -> 5 Linear layers; last layer breaks the shortcut.
    layer_sizes = (32, 32, 32, 32, 32, 16)
    batch = 8

    key = jax.random.PRNGKey(0)
    key, kx, kp = jax.random.split(key, 3)
    x = jax.random.normal(kx, (batch, layer_sizes[0]), jnp.float32)
    weights, biases = init_params(kp, layer_sizes)

    ew_dtype = elementwise_dtype()
    # Pack/pad params ONCE (hoisted out of the per-call path).
    w_stack, b_stack = pack_params(weights, biases, ew_dtype=ew_dtype)
    w_stack, b_stack = jax.block_until_ready((w_stack, b_stack))

    for use_shortcut in (True, False):
        out = example_deep_nn_forward(x, w_stack, b_stack,
                                      layer_sizes=layer_sizes,
                                      use_shortcut=use_shortcut,
                                      ew_dtype=ew_dtype)
        out = jax.block_until_ready(out)
        ref = reference_forward(x, weights, biases, use_shortcut=use_shortcut)
        assert out.shape == (batch, layer_sizes[-1])
        # bf16 matmul inputs (+ bf16 GELU on v6e/v7x) -> relaxed tolerance vs f32.
        assert jnp.allclose(out, ref, atol=3e-2, rtol=3e-2), \
            f"mismatch vs reference (use_shortcut={use_shortcut})"

    print("KERNEL_OK")
</pallas_src>

<mosaic_0001>
module attributes {stable_mosaic.version = 11 : i64} {
  func.func @mlp_kernel(%arg0: i32, %arg1: memref<8x128xbf16, #tpu.memory_space<vmem>>, %arg2: memref<5x128x128xbf16, #tpu.memory_space<vmem>>, %arg3: memref<5x1x128xf32, #tpu.memory_space<vmem>>, %arg4: memref<8x128xf32, #tpu.memory_space<vmem>>) attributes {dimension_semantics = [#tpu.dimension_semantics<parallel>], iteration_bounds = array<i64: 1>, scalar_prefetch = 0 : i64, scratch_operands = 0 : i64, tpu.core_type = #tpu.core_type<tc>, window_params = [{transform_indices = @transform_0, window_bounds = array<i64: 8, 128>}, {pipeline_mode = #tpu.pipeline_mode<synchronous>, transform_indices = @transform_1, window_bounds = array<i64: 5, 128, 128>}, {pipeline_mode = #tpu.pipeline_mode<synchronous>, transform_indices = @transform_2, window_bounds = array<i64: 5, 1, 128>}, {transform_indices = @transform_3, window_bounds = array<i64: 8, 128>}]} {
    %c0 = arith.constant 0 : index
    %c0_0 = arith.constant 0 : index
    %0 = vector.load %arg1[%c0, %c0_0] : memref<8x128xbf16, #tpu.memory_space<vmem>>, vector<8x128xbf16>
    %c0_1 = arith.constant 0 : index
    %c0_2 = arith.constant 0 : index
    %c0_3 = arith.constant 0 : index
    %1 = vector.load %arg2[%c0_1, %c0_2, %c0_3] : memref<5x128x128xbf16, #tpu.memory_space<vmem>>, vector<1x128x128xbf16>
    %2 = vector.shape_cast %1 : vector<1x128x128xbf16> to vector<128x128xbf16>
    %cst = arith.constant dense<0.000000e+00> : vector<8x128xf32>
    %3 = tpu.matmul %0, %2, %cst {dimension_numbers = #tpu.dot_dimension_numbers<[1], [0], [0], [1], [0, 0, 1, 1], [], []>} : vector<8x128xbf16>, vector<128x128xbf16>, vector<8x128xf32> -> vector<8x128xf32>
    %c0_4 = arith.constant 0 : index
    %c0_5 = arith.constant 0 : index
    %c0_6 = arith.constant 0 : index
    %4 = vector.load %arg3[%c0_4, %c0_5, %c0_6] : memref<5x1x128xf32, #tpu.memory_space<vmem>>, vector<1x1x128xf32>
    %5 = vector.shape_cast %4 : vector<1x1x128xf32> to vector<1x128xf32>
    %6 = vector.broadcast %5 : vector<1x128xf32> to vector<8x128xf32>
    %7 = arith.addf %3, %6 : vector<8x128xf32>
    %8 = arith.mulf %7, %7 : vector<8x128xf32>
    %cst_7 = arith.constant 0.0356774069 : f32
    %9 = vector.broadcast %cst_7 : f32 to vector<8x128xf32>
    %10 = arith.mulf %9, %8 : vector<8x128xf32>
    %cst_8 = arith.constant 0.797884583 : f32
    %11 = vector.broadcast %cst_8 : f32 to vector<8x128xf32>
    %12 = arith.addf %11, %10 : vector<8x128xf32>
    %13 = arith.mulf %7, %12 : vector<8x128xf32>
    %cst_9 = arith.constant 5.000000e-01 : f32
    %14 = vector.broadcast %cst_9 : f32 to vector<8x128xf32>
    %15 = arith.mulf %14, %7 : vector<8x128xf32>
    %16 = math.tanh %13 : vector<8x128xf32>
    %cst_10 = arith.constant 1.000000e+00 : f32
    %17 = vector.broadcast %cst_10 : f32 to vector<8x128xf32>
    %18 = arith.addf %17, %16 : vector<8x128xf32>
    %19 = arith.mulf %15, %18 : vector<8x128xf32>
    %20 = arith.extf %0 : vector<8x128xbf16> to vector<8x128xf32>
    %21 = arith.addf %20, %19 : vector<8x128xf32>
    %22 = arith.truncf %21 : vector<8x128xf32> to vector<8x128xbf16>
    %c1 = arith.constant 1 : index
    %c0_11 = arith.constant 0 : index
    %c0_12 = arith.constant 0 : index
    %23 = vector.load %arg2[%c1, %c0_11, %c0_12] : memref<5x128x128xbf16, #tpu.memory_space<vmem>>, vector<1x128x128xbf16>
    %24 = vector.shape_cast %23 : vector<1x128x128xbf16> to vector<128x128xbf16>
    %cst_13 = arith.constant dense<0.000000e+00> : vector<8x128xf32>
    %25 = tpu.matmul %22, %24, %cst_13 {dimension_numbers = #tpu.dot_dimension_numbers<[1], [0], [0], [1], [0, 0, 1, 1], [], []>} : vector<8x128xbf16>, vector<128x128xbf16>, vector<8x128xf32> -> vector<8x128xf32>
    %c1_14 = arith.constant 1 : index
    %c0_15 = arith.constant 0 : index
    %c0_16 = arith.constant 0 : index
    %26 = vector.load %arg3[%c1_14, %c0_15, %c0_16] : memref<5x1x128xf32, #tpu.memory_space<vmem>>, vector<1x1x128xf32>
    %27 = vector.shape_cast %26 : vector<1x1x128xf32> to vector<1x128xf32>
    %28 = vector.broadcast %27 : vector<1x128xf32> to vector<8x128xf32>
    %29 = arith.addf %25, %28 : vector<8x128xf32>
    %30 = arith.mulf %29, %29 : vector<8x128xf32>
    %cst_17 = arith.constant 0.0356774069 : f32
    %31 = vector.broadcast %cst_17 : f32 to vector<8x128xf32>
    %32 = arith.mulf %31, %30 : vector<8x128xf32>
    %cst_18 = arith.constant 0.797884583 : f32
    %33 = vector.broadcast %cst_18 : f32 to vector<8x128xf32>
    %34 = arith.addf %33, %32 : vector<8x128xf32>
    %35 = arith.mulf %29, %34 : vector<8x128xf32>
    %cst_19 = arith.constant 5.000000e-01 : f32
    %36 = vector.broadcast %cst_19 : f32 to vector<8x128xf32>
    %37 = arith.mulf %36, %29 : vector<8x128xf32>
    %38 = math.tanh %35 : vector<8x128xf32>
    %cst_20 = arith.constant 1.000000e+00 : f32
    %39 = vector.broadcast %cst_20 : f32 to vector<8x128xf32>
    %40 = arith.addf %39, %38 : vector<8x128xf32>
    %41 = arith.mulf %37, %40 : vector<8x128xf32>
    %42 = arith.addf %21, %41 : vector<8x128xf32>
    %43 = arith.truncf %42 : vector<8x128xf32> to vector<8x128xbf16>
    %c2 = arith.constant 2 : index
    %c0_21 = arith.constant 0 : index
    %c0_22 = arith.constant 0 : index
    %44 = vector.load %arg2[%c2, %c0_21, %c0_22] : memref<5x128x128xbf16, #tpu.memory_space<vmem>>, vector<1x128x128xbf16>
    %45 = vector.shape_cast %44 : vector<1x128x128xbf16> to vector<128x128xbf16>
    %cst_23 = arith.constant dense<0.000000e+00> : vector<8x128xf32>
    %46 = tpu.matmul %43, %45, %cst_23 {dimension_numbers = #tpu.dot_dimension_numbers<[1], [0], [0], [1], [0, 0, 1, 1], [], []>} : vector<8x128xbf16>, vector<128x128xbf16>, vector<8x128xf32> -> vector<8x128xf32>
    %c2_24 = arith.constant 2 : index
    %c0_25 = arith.constant 0 : index
    %c0_26 = arith.constant 0 : index
    %47 = vector.load %arg3[%c2_24, %c0_25, %c0_26] : memref<5x1x128xf32, #tpu.memory_space<vmem>>, vector<1x1x128xf32>
    %48 = vector.shape_cast %47 : vector<1x1x128xf32> to vector<1x128xf32>
    %49 = vector.broadcast %48 : vector<1x128xf32> to vector<8x128xf32>
    %50 = arith.addf %46, %49 : vector<8x128xf32>
    %51 = arith.mulf %50, %50 : vector<8x128xf32>
    %cst_27 = arith.constant 0.0356774069 : f32
    %52 = vector.broadcast %cst_27 : f32 to vector<8x128xf32>
    %53 = arith.mulf %52, %51 : vector<8x128xf32>
    %cst_28 = arith.constant 0.797884583 : f32
    %54 = vector.broadcast %cst_28 : f32 to vector<8x128xf32>
    %55 = arith.addf %54, %53 : vector<8x128xf32>
    %56 = arith.mulf %50, %55 : vector<8x128xf32>
    %cst_29 = arith.constant 5.000000e-01 : f32
    %57 = vector.broadcast %cst_29 : f32 to vector<8x128xf32>
    %58 = arith.mulf %57, %50 : vector<8x128xf32>
    %59 = math.tanh %56 : vector<8x128xf32>
    %cst_30 = arith.constant 1.000000e+00 : f32
    %60 = vector.broadcast %cst_30 : f32 to vector<8x128xf32>
    %61 = arith.addf %60, %59 : vector<8x128xf32>
    %62 = arith.mulf %58, %61 : vector<8x128xf32>
    %63 = arith.addf %42, %62 : vector<8x128xf32>
    %64 = arith.truncf %63 : vector<8x128xf32> to vector<8x128xbf16>
    %c3 = arith.constant 3 : index
    %c0_31 = arith.constant 0 : index
    %c0_32 = arith.constant 0 : index
    %65 = vector.load %arg2[%c3, %c0_31, %c0_32] : memref<5x128x128xbf16, #tpu.memory_space<vmem>>, vector<1x128x128xbf16>
    %66 = vector.shape_cast %65 : vector<1x128x128xbf16> to vector<128x128xbf16>
    %cst_33 = arith.constant dense<0.000000e+00> : vector<8x128xf32>
    %67 = tpu.matmul %64, %66, %cst_33 {dimension_numbers = #tpu.dot_dimension_numbers<[1], [0], [0], [1], [0, 0, 1, 1], [], []>} : vector<8x128xbf16>, vector<128x128xbf16>, vector<8x128xf32> -> vector<8x128xf32>
    %c3_34 = arith.constant 3 : index
    %c0_35 = arith.constant 0 : index
    %c0_36 = arith.constant 0 : index
    %68 = vector.load %arg3[%c3_34, %c0_35, %c0_36] : memref<5x1x128xf32, #tpu.memory_space<vmem>>, vector<1x1x128xf32>
    %69 = vector.shape_cast %68 : vector<1x1x128xf32> to vector<1x128xf32>
    %70 = vector.broadcast %69 : vector<1x128xf32> to vector<8x128xf32>
    %71 = arith.addf %67, %70 : vector<8x128xf32>
    %72 = arith.mulf %71, %71 : vector<8x128xf32>
    %cst_37 = arith.constant 0.0356774069 : f32
    %73 = vector.broadcast %cst_37 : f32 to vector<8x128xf32>
    %74 = arith.mulf %73, %72 : vector<8x128xf32>
    %cst_38 = arith.constant 0.797884583 : f32
    %75 = vector.broadcast %cst_38 : f32 to vector<8x128xf32>
    %76 = arith.addf %75, %74 : vector<8x128xf32>
    %77 = arith.mulf %71, %76 : vector<8x128xf32>
    %cst_39 = arith.constant 5.000000e-01 : f32
    %78 = vector.broadcast %cst_39 : f32 to vector<8x128xf32>
    %79 = arith.mulf %78, %71 : vector<8x128xf32>
    %80 = math.tanh %77 : vector<8x128xf32>
    %cst_40 = arith.constant 1.000000e+00 : f32
    %81 = vector.broadcast %cst_40 : f32 to vector<8x128xf32>
    %82 = arith.addf %81, %80 : vector<8x128xf32>
    %83 = arith.mulf %79, %82 : vector<8x128xf32>
    %84 = arith.addf %63, %83 : vector<8x128xf32>
    %85 = arith.truncf %84 : vector<8x128xf32> to vector<8x128xbf16>
    %c4 = arith.constant 4 : index
    %c0_41 = arith.constant 0 : index
    %c0_42 = arith.constant 0 : index
    %86 = vector.load %arg2[%c4, %c0_41, %c0_42] : memref<5x128x128xbf16, #tpu.memory_space<vmem>>, vector<1x128x128xbf16>
    %87 = vector.shape_cast %86 : vector<1x128x128xbf16> to vector<128x128xbf16>
    %cst_43 = arith.constant dense<0.000000e+00> : vector<8x128xf32>
    %88 = tpu.matmul %85, %87, %cst_43 {dimension_numbers = #tpu.dot_dimension_numbers<[1], [0], [0], [1], [0, 0, 1, 1], [], []>} : vector<8x128xbf16>, vector<128x128xbf16>, vector<8x128xf32> -> vector<8x128xf32>
    %c4_44 = arith.constant 4 : index
    %c0_45 = arith.constant 0 : index
    %c0_46 = arith.constant 0 : index
    %89 = vector.load %arg3[%c4_44, %c0_45, %c0_46] : memref<5x1x128xf32, #tpu.memory_space<vmem>>, vector<1x1x128xf32>
    %90 = vector.shape_cast %89 : vector<1x1x128xf32> to vector<1x128xf32>
    %91 = vector.broadcast %90 : vector<1x128xf32> to vector<8x128xf32>
    %92 = arith.addf %88, %91 : vector<8x128xf32>
    %93 = arith.mulf %92, %92 : vector<8x128xf32>
    %cst_47 = arith.constant 0.0356774069 : f32
    %94 = vector.broadcast %cst_47 : f32 to vector<8x128xf32>
    %95 = arith.mulf %94, %93 : vector<8x128xf32>
    %cst_48 = arith.constant 0.797884583 : f32
    %96 = vector.broadcast %cst_48 : f32 to vector<8x128xf32>
    %97 = arith.addf %96, %95 : vector<8x128xf32>
    %98 = arith.mulf %92, %97 : vector<8x128xf32>
    %cst_49 = arith.constant 5.000000e-01 : f32
    %99 = vector.broadcast %cst_49 : f32 to vector<8x128xf32>
    %100 = arith.mulf %99, %92 : vector<8x128xf32>
    %101 = math.tanh %98 : vector<8x128xf32>
    %cst_50 = arith.constant 1.000000e+00 : f32
    %102 = vector.broadcast %cst_50 : f32 to vector<8x128xf32>
    %103 = arith.addf %102, %101 : vector<8x128xf32>
    %104 = arith.mulf %100, %103 : vector<8x128xf32>
    %c0_51 = arith.constant 0 : index
    %c0_52 = arith.constant 0 : index
    %105 = vector.load %arg4[%c0_51, %c0_52] : memref<8x128xf32, #tpu.memory_space<vmem>>, vector<8x128xf32>
    tpu.vector_store %arg4[%c0_51, %c0_52], %104 {strides = array<i32>} : memref<8x128xf32, #tpu.memory_space<vmem>>, vector<8x128xf32>,
    return
  }
  func.func @transform_0(%arg0: i32) -> (i32, i32) {
    %c0_i32 = arith.constant 0 : i32
    %c0_i32_0 = arith.constant 0 : i32
    return %arg0, %c0_i32 : i32, i32
  }
  func.func @transform_1(%arg0: i32) -> (i32, i32, i32) {
    %c0_i32 = arith.constant 0 : i32
    %c0_i32_0 = arith.constant 0 : i32
    %c0_i32_1 = arith.constant 0 : i32
    %c0_i32_2 = arith.constant 0 : i32
    return %c0_i32, %c0_i32_0, %c0_i32_1 : i32, i32, i32
  }
  func.func @transform_2(%arg0: i32) -> (i32, i32, i32) {
    %c0_i32 = arith.constant 0 : i32
    %c0_i32_0 = arith.constant 0 : i32
    %c0_i32_1 = arith.constant 0 : i32
    %c0_i32_2 = arith.constant 0 : i32
    return %c0_i32, %c0_i32_0, %c0_i32_1 : i32, i32, i32
  }
  func.func @transform_3(%arg0: i32) -> (i32, i32) {
    %c0_i32 = arith.constant 0 : i32
    %c0_i32_0 = arith.constant 0 : i32
    return %arg0, %c0_i32 : i32, i32
  }
}

</mosaic_0001>

<llo_original>
// kernel: example_deep_nn_forward.1
$region0: #{example_deep_nn_forward.1}
  #allocation0 [shape = 'u32[]', space=smem, size = 0x4, offset = 0x4, fixed_abs, tag = 'smem constant byte address 0x4 - core index']
  #allocation1 [shape = 'u32[144,128]{1,0:T(1,128)}', space=vmem, size = 0x12000, scoped, tag = 'internal scratch']
  %s0 = inlined_call_operand.vmem [shape: bf16[8,128], index: 0, kind: input, shape index: {}]
  %s1 = inlined_call_operand.hbm [shape: bf16[5,128,128], index: 1, kind: input, shape index: {}]
  %s2 = inlined_call_operand.vmem [shape: f32[5,1,128], index: 2, kind: input, shape index: {}]
  %s3 = inlined_call_operand.hbm [shape: f32[8,128], index: 3, kind: output, shape index: {}]
  %s4 = sld [smem:[#allocation0]]
  $region26: #{example_deep_nn_forward.1} parent=0
    _
  %s6 = ssub.s32 1, %s4
  %s7 = scalar_select 0, %s6, %s4
  $region1: #{example_deep_nn_forward.1} parent=0
    #allocation2 [shape = 'u8[163840]{0}', space=vmem, size = 0x28000, scoped, tag = 'input window, operand 1, single buffered']
    #allocation3 [shape = 's32[1]{0}', space=sflag, size = 0x4, scoped, tag = 'scoped memory for example_deep_nn_forward.1']
    #allocation4 [shape = 's32[1]{0}', space=sflag, size = 0x4, scoped, tag = 'scoped memory for example_deep_nn_forward.1']
    #allocation5 [shape = 'u8[4096]{0}', space=vmem, size = 0x1000, scoped, tag = 'output window, operand 0, single buffered']
    %8 = vsyncpa [#allocation3], 0
    %9 = vsyncpa [#allocation4], 0
    // Predicated region
    $region2: #{example_deep_nn_forward.1} parent=1 // pred_check
      _
    $region3: #{example_deep_nn_forward.1} parent=1 // pred_check_branch
      %11 = sbr.rel (0) target = $region5
    $region4: #{example_deep_nn_forward.1} parent=1 // pred_region
      _
    $region5: #{example_deep_nn_forward.1} parent=1 // pred_fallthru
      _
    // Predicated region
    $region6: #{example_deep_nn_forward.1} parent=1 // pred_check
      _
    $region7: #{example_deep_nn_forward.1} parent=1 // pred_check_branch
      %13 = sbr.rel (0) target = $region9
    $region8: #{example_deep_nn_forward.1} parent=1 // pred_region
      %s15 = ssub.s32 5120, 5120
      %16 = vsyncadd [#allocation3], %s15
      %s17 = sshll.u32 [#allocation2], 4
      %s18 = int_to_ptr.vmem [resolvable:$true] %s17
      %23 = dma.hbm_to_vmem [thread:$0]  %s1, 5120, %s18, [#allocation3], 64, 64, 4
    $region9: #{example_deep_nn_forward.1} parent=1 // pred_fallthru
      _
    // Predicated region
    $region10: #{example_deep_nn_forward.1} parent=1 // pred_check
      _
    $region11: #{example_deep_nn_forward.1} parent=1 // pred_check_branch
      %25 = sbr.rel (0) target = $region13
    $region12: #{example_deep_nn_forward.1} parent=1 // pred_region
      _
    $region13: #{example_deep_nn_forward.1} parent=1 // pred_fallthru
      _
    // Predicated region
    $region14: #{example_deep_nn_forward.1} parent=1 // pred_check
      _
    $region15: #{example_deep_nn_forward.1} parent=1 // pred_check_branch
      %27 = sbr.rel (0) target = $region17
    $region16: #{example_deep_nn_forward.1} parent=1 // pred_region
      %28 = dma.done [#allocation3], 5120
    $region17: #{example_deep_nn_forward.1} parent=1 // pred_fallthru
      _
    %v30 = vld [vmem:[%s0] sm:$0xf]
    %v31 = vld [vmem:[#allocation2] sm:$0xf]
    %v32 = vld [vmem:[#allocation2 + $0x4] sm:$0xf]
    %v33 = vld [vmem:[#allocation2 + $0x8] sm:$0xf]
    %v34 = vld [vmem:[#allocation2 + $0xc] sm:$0xf]
    %v35 = vld [vmem:[#allocation2 + $0x10] sm:$0xf]
    %v36 = vld [vmem:[#allocation2 + $0x14] sm:$0xf]
    %v37 = vld [vmem:[#allocation2 + $0x18] sm:$0xf]
    %v38 = vld [vmem:[#allocation2 + $0x1c] sm:$0xf]
    %v39 = vld [vmem:[#allocation2 + $0x20] sm:$0xf]
    %v40 = vld [vmem:[#allocation2 + $0x24] sm:$0xf]
    %v41 = vld [vmem:[#allocation2 + $0x28] sm:$0xf]
    %v42 = vld [vmem:[#allocation2 + $0x2c] sm:$0xf]
    %v43 = vld [vmem:[#allocation2 + $0x30] sm:$0xf]
    %v44 = vld [vmem:[#allocation2 + $0x34] sm:$0xf]
    %v45 = vld [vmem:[#allocation2 + $0x38] sm:$0xf]
    %v46 = vld [vmem:[#allocation2 + $0x3c] sm:$0xf]
    %v47 = vld [vmem:[%s2] sm:$0x1]
    %v49 = vlaneseq
    %v50 = vshrl.u32 %v49, 7
    %v51 = vsub.s32 0, %v50
    %v52 = vrot.slane %v47, %v51
    %v70 = vunpack.c.l.b16 %v31
    %v71 = vunpack.c.l.b16 %v32
    %v72 = vunpack.c.l.b16 %v33
    %v73 = vunpack.c.l.b16 %v34
    %v74 = vunpack.c.l.b16 %v35
    %v75 = vunpack.c.l.b16 %v36
    %v76 = vunpack.c.l.b16 %v37
    %v77 = vunpack.c.l.b16 %v38
    %v78 = vunpack.c.l.b16 %v39
    %v79 = vunpack.c.l.b16 %v40
    %v80 = vunpack.c.l.b16 %v41
    %v81 = vunpack.c.l.b16 %v42
    %v82 = vunpack.c.l.b16 %v43
    %v83 = vunpack.c.l.b16 %v44
    %v84 = vunpack.c.l.b16 %v45
    %v85 = vunpack.c.l.b16 %v46
    %v86 = vpack.c.b16 %v71, %v70
    %v87 = vpack.c.b16 %v73, %v72
    %v88 = vpack.c.b16 %v75, %v74
    %v89 = vpack.c.b16 %v77, %v76
    %v90 = vpack.c.b16 %v79, %v78
    %v91 = vpack.c.b16 %v81, %v80
    %v92 = vpack.c.b16 %v83, %v82
    %v93 = vpack.c.b16 %v85, %v84
    %102 = vmatprep.subr.bf16.mxu0 0
    %103 = vmatpush1.bf16.msra.mxu0 %v86
    %104 = vmatprep.subr.bf16.mxu0 0
    %105 = vmatpush1.bf16.msra.mxu0 %v87
    %106 = vmatprep.subr.bf16.mxu0 0
    %107 = vmatpush1.bf16.msra.mxu0 %v88
    %108 = vmatprep.subr.bf16.mxu0 0
    %109 = vmatpush1.bf16.msra.mxu0 %v89
    %110 = vmatprep.subr.bf16.mxu0 0
    %111 = vmatpush1.bf16.msra.mxu0 %v90
    %112 = vmatprep.subr.bf16.mxu0 0
    %113 = vmatpush1.bf16.msra.mxu0 %v91
    %114 = vmatprep.subr.bf16.mxu0 0
    %115 = vmatpush1.bf16.msra.mxu0 %v92
    %116 = vmatprep.subr.bf16.mxu0 0
    %117 = vmatpush1.bf16.msra.mxu0 %v93
    %118 = vmatprep.subr.bf16.mxu0 0
    %119 = vmatpush1.bf16.msra.mxu0 0
    %120 = vmatprep.subr.bf16.mxu0 0
    %121 = vmatpush1.bf16.msra.mxu0 0
    %122 = vmatprep.subr.bf16.mxu0 0
    %123 = vmatpush1.bf16.msra.mxu0 0
    %124 = vmatprep.subr.bf16.mxu0 0
    %125 = vmatpush1.bf16.msra.mxu0 0
    %126 = vmatprep.subr.bf16.mxu0 0
    %127 = vmatpush1.bf16.msra.mxu0 0
    %128 = vmatprep.subr.bf16.mxu0 0
    %129 = vmatpush1.bf16.msra.mxu0 0
    %130 = vmatprep.subr.bf16.mxu0 0
    %131 = vmatpush1.bf16.msra.mxu0 0
    %132 = vmatprep.subr.bf16.mxu0 0
    %133 = vmatpush1.bf16.msra.mxu0 0
    %134 = vmatprep.mubr.bf16.mxu0 0
    %135 = vmatmul.mubr.bf16.gmra.mrb[0].mxu0 %v30
    %v136 = vpop.f32.mrb[0].mxu0
    %v137 = vadd.f32 %v52, %v136
    %v138 = vpop.f32.mrb[0].mxu0
    %v139 = vpop.f32.mrb[0].mxu0
    %v140 = vpop.f32.mrb[0].mxu0
    %141 = vdwg.mxu0
    %v142 = vmul.f32 %v137, %v137
    %v143 = vmul.f32 %v142, 0.035677407
    %v144 = vadd.f32 %v143, 0.7978846
    %v145 = vmul.f32 %v137, %v144
    %v146 = vmul.f32 %v137, 0.5
    %v147 = vtanh.pop %v145
    %v148 = vadd.f32 %v147, 1.0
    %v149 = vmul.f32 %v146, %v148
    %v150 = vunpack.c.l.bf16 %v30
    %v151 = vadd.f32 %v150, %v149
    %v152 = vpack.c.bf16 %v151, %v151
    %s153 = scalar_lea.vmem [#allocation2], 64
    %v154 = vld [vmem:[%s153] sm:$0xf]
    %v155 = vld [vmem:[%s153 + $0x4] sm:$0xf]
    %v156 = vld [vmem:[%s153 + $0x8] sm:$0xf]
    %v157 = vld [vmem:[%s153 + $0xc] sm:$0xf]
    %v158 = vld [vmem:[%s153 + $0x10] sm:$0xf]
    %v159 = vld [vmem:[%s153 + $0x14] sm:$0xf]
    %v160 = vld [vmem:[%s153 + $0x18] sm:$0xf]
    %v161 = vld [vmem:[%s153 + $0x1c] sm:$0xf]
    %v162 = vld [vmem:[%s153 + $0x20] sm:$0xf]
    %v163 = vld [vmem:[%s153 + $0x24] sm:$0xf]
    %v164 = vld [vmem:[%s153 + $0x28] sm:$0xf]
    %v165 = vld [vmem:[%s153 + $0x2c] sm:$0xf]
    %v166 = vld [vmem:[%s153 + $0x30] sm:$0xf]
    %v167 = vld [vmem:[%s153 + $0x34] sm:$0xf]
    %v168 = vld [vmem:[%s153 + $0x38] sm:$0xf]
    %v169 = vld [vmem:[%s153 + $0x3c] sm:$0xf]
    %s170 = scalar_lea.vmem %s2, 1
    %v171 = vld [vmem:[%s170] sm:$0x1]
    %v173 = vlaneseq
    %v174 = vshrl.u32 %v173, 7
    %v175 = vsub.s32 0, %v174
    %v176 = vrot.slane %v171, %v175
    %v194 = vunpack.c.l.b16 %v154
    %v195 = vunpack.c.l.b16 %v155
    %v196 = vunpack.c.l.b16 %v156
    %v197 = vunpack.c.l.b16 %v157
    %v198 = vunpack.c.l.b16 %v158
    %v199 = vunpack.c.l.b16 %v159
    %v200 = vunpack.c.l.b16 %v160
    %v201 = vunpack.c.l.b16 %v161
    %v202 = vunpack.c.l.b16 %v162
    %v203 = vunpack.c.l.b16 %v163
    %v204 = vunpack.c.l.b16 %v164
    %v205 = vunpack.c.l.b16 %v165
    %v206 = vunpack.c.l.b16 %v166
    %v207 = vunpack.c.l.b16 %v167
    %v208 = vunpack.c.l.b16 %v168
    %v209 = vunpack.c.l.b16 %v169
    %v210 = vpack.c.b16 %v195, %v194
    %v211 = vpack.c.b16 %v197, %v196
    %v212 = vpack.c.b16 %v199, %v198
    %v213 = vpack.c.b16 %v201, %v200
    %v214 = vpack.c.b16 %v203, %v202
    %v215 = vpack.c.b16 %v205, %v204
    %v216 = vpack.c.b16 %v207, %v206
    %v217 = vpack.c.b16 %v209, %v208
    %226 = vmatprep.subr.bf16.mxu0 0
    %227 = vmatpush1.bf16.msra.mxu0 %v210
    %228 = vmatprep.subr.bf16.mxu0 0
    %229 = vmatpush1.bf16.msra.mxu0 %v211
    %230 = vmatprep.subr.bf16.mxu0 0
    %231 = vmatpush1.bf16.msra.mxu0 %v212
    %232 = vmatprep.subr.bf16.mxu0 0
    %233 = vmatpush1.bf16.msra.mxu0 %v213
    %234 = vmatprep.subr.bf16.mxu0 0
    %235 = vmatpush1.bf16.msra.mxu0 %v214
    %236 = vmatprep.subr.bf16.mxu0 0
    %237 = vmatpush1.bf16.msra.mxu0 %v215
    %238 = vmatprep.subr.bf16.mxu0 0
    %239 = vmatpush1.bf16.msra.mxu0 %v216
    %240 = vmatprep.subr.bf16.mxu0 0
    %241 = vmatpush1.bf16.msra.mxu0 %v217
    %242 = vmatprep.subr.bf16.mxu0 0
    %243 = vmatpush1.bf16.msra.mxu0 0
    %244 = vmatprep.subr.bf16.mxu0 0
    %245 = vmatpush1.bf16.msra.mxu0 0
    %246 = vmatprep.subr.bf16.mxu0 0
    %247 = vmatpush1.bf16.msra.mxu0 0
    %248 = vmatprep.subr.bf16.mxu0 0
    %249 = vmatpush1.bf16.msra.mxu0 0
    %250 = vmatprep.subr.bf16.mxu0 0
    %251 = vmatpush1.bf16.msra.mxu0 0
    %252 = vmatprep.subr.bf16.mxu0 0
    %253 = vmatpush1.bf16.msra.mxu0 0
    %254 = vmatprep.subr.bf16.mxu0 0
    %255 = vmatpush1.bf16.msra.mxu0 0
    %256 = vmatprep.subr.bf16.mxu0 0
    %257 = vmatpush1.bf16.msra.mxu0 0
    %258 = vmatprep.mubr.bf16.mxu0 0
    %259 = vmatmul.mubr.bf16.gmra.mrb[0].mxu0 %v152
    %v260 = vpop.f32.mrb[0].mxu0
    %v261 = vadd.f32 %v176, %v260
    %v262 = vpop.f32.mrb[0].mxu0
    %v263 = vpop.f32.mrb[0].mxu0
    %v264 = vpop.f32.mrb[0].mxu0
    %265 = vdwg.mxu0
    %v266 = vmul.f32 %v261, %v261
    %v267 = vmul.f32 %v266, 0.035677407
    %v268 = vadd.f32 %v267, 0.7978846
    %v269 = vmul.f32 %v261, %v268
    %v270 = vmul.f32 %v261, 0.5
    %v271 = vtanh.pop %v269
    %v272 = vadd.f32 %v271, 1.0
    %v273 = vmul.f32 %v270, %v272
    %v274 = vadd.f32 %v151, %v273
    %v275 = vpack.c.bf16 %v274, %v274
    %s276 = scalar_lea.vmem [#allocation2], 128
    %v277 = vld [vmem:[%s276] sm:$0xf]
    %v278 = vld [vmem:[%s276 + $0x4] sm:$0xf]
    %v279 = vld [vmem:[%s276 + $0x8] sm:$0xf]
    %v280 = vld [vmem:[%s276 + $0xc] sm:$0xf]
    %v281 = vld [vmem:[%s276 + $0x10] sm:$0xf]
    %v282 = vld [vmem:[%s276 + $0x14] sm:$0xf]
    %v283 = vld [vmem:[%s276 + $0x18] sm:$0xf]
    %v284 = vld [vmem:[%s276 + $0x1c] sm:$0xf]
    %v285 = vld [vmem:[%s276 + $0x20] sm:$0xf]
    %v286 = vld [vmem:[%s276 + $0x24] sm:$0xf]
    %v287 = vld [vmem:[%s276 + $0x28] sm:$0xf]
    %v288 = vld [vmem:[%s276 + $0x2c] sm:$0xf]
    %v289 = vld [vmem:[%s276 + $0x30] sm:$0xf]
    %v290 = vld [vmem:[%s276 + $0x34] sm:$0xf]
    %v291 = vld [vmem:[%s276 + $0x38] sm:$0xf]
    %v292 = vld [vmem:[%s276 + $0x3c] sm:$0xf]
    %s293 = scalar_lea.vmem %s2, 2
    %v294 = vld [vmem:[%s293] sm:$0x1]
    %v296 = vlaneseq
    %v297 = vshrl.u32 %v296, 7
    %v298 = vsub.s32 0, %v297
    %v299 = vrot.slane %v294, %v298
    %v317 = vunpack.c.l.b16 %v277
    %v318 = vunpack.c.l.b16 %v278
    %v319 = vunpack.c.l.b16 %v279
    %v320 = vunpack.c.l.b16 %v280
    %v321 = vunpack.c.l.b16 %v281
    %v322 = vunpack.c.l.b16 %v282
    %v323 = vunpack.c.l.b16 %v283
    %v324 = vunpack.c.l.b16 %v284
    %v325 = vunpack.c.l.b16 %v285
    %v326 = vunpack.c.l.b16 %v286
    %v327 = vunpack.c.l.b16 %v287
    %v328 = vunpack.c.l.b16 %v288
    %v329 = vunpack.c.l.b16 %v289
    %v330 = vunpack.c.l.b16 %v290
    %v331 = vunpack.c.l.b16 %v291
    %v332 = vunpack.c.l.b16 %v292
    %v333 = vpack.c.b16 %v318, %v317
    %v334 = vpack.c.b16 %v320, %v319
    %v335 = vpack.c.b16 %v322, %v321
    %v336 = vpack.c.b16 %v324, %v323
    %v337 = vpack.c.b16 %v326, %v325
    %v338 = vpack.c.b16 %v328, %v327
    %v339 = vpack.c.b16 %v330, %v329
    %v340 = vpack.c.b16 %v332, %v331
    %349 = vmatprep.subr.bf16.mxu0 0
    %350 = vmatpush1.bf16.msra.mxu0 %v333
    %351 = vmatprep.subr.bf16.mxu0 0
    %352 = vmatpush1.bf16.msra.mxu0 %v334
    %353 = vmatprep.subr.bf16.mxu0 0
    %354 = vmatpush1.bf16.msra.mxu0 %v335
    %355 = vmatprep.subr.bf16.mxu0 0
    %356 = vmatpush1.bf16.msra.mxu0 %v336
    %357 = vmatprep.subr.bf16.mxu0 0
    %358 = vmatpush1.bf16.msra.mxu0 %v337
    %359 = vmatprep.subr.bf16.mxu0 0
    %360 = vmatpush1.bf16.msra.mxu0 %v338
    %361 = vmatprep.subr.bf16.mxu0 0
    %362 = vmatpush1.bf16.msra.mxu0 %v339
    %363 = vmatprep.subr.bf16.mxu0 0
    %364 = vmatpush1.bf16.msra.mxu0 %v340
    %365 = vmatprep.subr.bf16.mxu0 0
    %366 = vmatpush1.bf16.msra.mxu0 0
    %367 = vmatprep.subr.bf16.mxu0 0
    %368 = vmatpush1.bf16.msra.mxu0 0
    %369 = vmatprep.subr.bf16.mxu0 0
    %370 = vmatpush1.bf16.msra.mxu0 0
    %371 = vmatprep.subr.bf16.mxu0 0
    %372 = vmatpush1.bf16.msra.mxu0 0
    %373 = vmatprep.subr.bf16.mxu0 0
    %374 = vmatpush1.bf16.msra.mxu0 0
    %375 = vmatprep.subr.bf16.mxu0 0
    %376 = vmatpush1.bf16.msra.mxu0 0
    %377 = vmatprep.subr.bf16.mxu0 0
    %378 = vmatpush1.bf16.msra.mxu0 0
    %379 = vmatprep.subr.bf16.mxu0 0
    %380 = vmatpush1.bf16.msra.mxu0 0
    %381 = vmatprep.mubr.bf16.mxu0 0
    %382 = vmatmul.mubr.bf16.gmra.mrb[0].mxu0 %v275
    %v383 = vpop.f32.mrb[0].mxu0
    %v384 = vadd.f32 %v299, %v383
    %v385 = vpop.f32.mrb[0].mxu0
    %v386 = vpop.f32.mrb[0].mxu0
    %v387 = vpop.f32.mrb[0].mxu0
    %388 = vdwg.mxu0
    %v389 = vmul.f32 %v384, %v384
    %v390 = vmul.f32 %v389, 0.035677407
    %v391 = vadd.f32 %v390, 0.7978846
    %v392 = vmul.f32 %v384, %v391
    %v393 = vmul.f32 %v384, 0.5
    %v394 = vtanh.pop %v392
    %v395 = vadd.f32 %v394, 1.0
    %v396 = vmul.f32 %v393, %v395
    %v397 = vadd.f32 %v274, %v396
    %v398 = vpack.c.bf16 %v397, %v397
    %s399 = scalar_lea.vmem [#allocation2], 192
    %v400 = vld [vmem:[%s399] sm:$0xf]
    %v401 = vld [vmem:[%s399 + $0x4] sm:$0xf]
    %v402 = vld [vmem:[%s399 + $0x8] sm:$0xf]
    %v403 = vld [vmem:[%s399 + $0xc] sm:$0xf]
    %v404 = vld [vmem:[%s399 + $0x10] sm:$0xf]
    %v405 = vld [vmem:[%s399 + $0x14] sm:$0xf]
    %v406 = vld [vmem:[%s399 + $0x18] sm:$0xf]
    %v407 = vld [vmem:[%s399 + $0x1c] sm:$0xf]
    %v408 = vld [vmem:[%s399 + $0x20] sm:$0xf]
    %v409 = vld [vmem:[%s399 + $0x24] sm:$0xf]
    %v410 = vld [vmem:[%s399 + $0x28] sm:$0xf]
    %v411 = vld [vmem:[%s399 + $0x2c] sm:$0xf]
    %v412 = vld [vmem:[%s399 + $0x30] sm:$0xf]
    %v413 = vld [vmem:[%s399 + $0x34] sm:$0xf]
    %v414 = vld [vmem:[%s399 + $0x38] sm:$0xf]
    %v415 = vld [vmem:[%s399 + $0x3c] sm:$0xf]
    %s416 = scalar_lea.vmem %s2, 3
    %v417 = vld [vmem:[%s416] sm:$0x1]
    %v419 = vlaneseq
    %v420 = vshrl.u32 %v419, 7
    %v421 = vsub.s32 0, %v420
    %v422 = vrot.slane %v417, %v421
    %v440 = vunpack.c.l.b16 %v400
    %v441 = vunpack.c.l.b16 %v401
    %v442 = vunpack.c.l.b16 %v402
    %v443 = vunpack.c.l.b16 %v403
    %v444 = vunpack.c.l.b16 %v404
    %v445 = vunpack.c.l.b16 %v405
    %v446 = vunpack.c.l.b16 %v406
    %v447 = vunpack.c.l.b16 %v407
    %v448 = vunpack.c.l.b16 %v408
    %v449 = vunpack.c.l.b16 %v409
    %v450 = vunpack.c.l.b16 %v410
    %v451 = vunpack.c.l.b16 %v411
    %v452 = vunpack.c.l.b16 %v412
    %v453 = vunpack.c.l.b16 %v413
    %v454 = vunpack.c.l.b16 %v414
    %v455 = vunpack.c.l.b16 %v415
    %v456 = vpack.c.b16 %v441, %v440
    %v457 = vpack.c.b16 %v443, %v442
    %v458 = vpack.c.b16 %v445, %v444
    %v459 = vpack.c.b16 %v447, %v446
    %v460 = vpack.c.b16 %v449, %v448
    %v461 = vpack.c.b16 %v451, %v450
    %v462 = vpack.c.b16 %v453, %v452
    %v463 = vpack.c.b16 %v455, %v454
    %472 = vmatprep.subr.bf16.mxu0 0
    %473 = vmatpush1.bf16.msra.mxu0 %v456
    %474 = vmatprep.subr.bf16.mxu0 0
    %475 = vmatpush1.bf16.msra.mxu0 %v457
    %476 = vmatprep.subr.bf16.mxu0 0
    %477 = vmatpush1.bf16.msra.mxu0 %v458
    %478 = vmatprep.subr.bf16.mxu0 0
    %479 = vmatpush1.bf16.msra.mxu0 %v459
    %480 = vmatprep.subr.bf16.mxu0 0
    %481 = vmatpush1.bf16.msra.mxu0 %v460
    %482 = vmatprep.subr.bf16.mxu0 0
    %483 = vmatpush1.bf16.msra.mxu0 %v461
    %484 = vmatprep.subr.bf16.mxu0 0
    %485 = vmatpush1.bf16.msra.mxu0 %v462
    %486 = vmatprep.subr.bf16.mxu0 0
    %487 = vmatpush1.bf16.msra.mxu0 %v463
    %488 = vmatprep.subr.bf16.mxu0 0
    %489 = vmatpush1.bf16.msra.mxu0 0
    %490 = vmatprep.subr.bf16.mxu0 0
    %491 = vmatpush1.bf16.msra.mxu0 0
    %492 = vmatprep.subr.bf16.mxu0 0
    %493 = vmatpush1.bf16.msra.mxu0 0
    %494 = vmatprep.subr.bf16.mxu0 0
    %495 = vmatpush1.bf16.msra.mxu0 0
    %496 = vmatprep.subr.bf16.mxu0 0
    %497 = vmatpush1.bf16.msra.mxu0 0
    %498 = vmatprep.subr.bf16.mxu0 0
    %499 = vmatpush1.bf16.msra.mxu0 0
    %500 = vmatprep.subr.bf16.mxu0 0
    %501 = vmatpush1.bf16.msra.mxu0 0
    %502 = vmatprep.subr.bf16.mxu0 0
    %503 = vmatpush1.bf16.msra.mxu0 0
    %504 = vmatprep.mubr.bf16.mxu0 0
    %505 = vmatmul.mubr.bf16.gmra.mrb[0].mxu0 %v398
    %v506 = vpop.f32.mrb[0].mxu0
    %v507 = vadd.f32 %v422, %v506
    %v508 = vpop.f32.mrb[0].mxu0
    %v509 = vpop.f32.mrb[0].mxu0
    %v510 = vpop.f32.mrb[0].mxu0
    %511 = vdwg.mxu0
    %v512 = vmul.f32 %v507, %v507
    %v513 = vmul.f32 %v512, 0.035677407
    %v514 = vadd.f32 %v513, 0.7978846
    %v515 = vmul.f32 %v507, %v514
    %v516 = vmul.f32 %v507, 0.5
    %v517 = vtanh.pop %v515
    %v518 = vadd.f32 %v517, 1.0
    %v519 = vmul.f32 %v516, %v518
    %v520 = vadd.f32 %v397, %v519
    %v521 = vpack.c.bf16 %v520, %v520
    %s522 = scalar_lea.vmem [#allocation2], 256
    %v523 = vld [vmem:[%s522] sm:$0xf]
    %v524 = vld [vmem:[%s522 + $0x4] sm:$0xf]
    %v525 = vld [vmem:[%s522 + $0x8] sm:$0xf]
    %v526 = vld [vmem:[%s522 + $0xc] sm:$0xf]
    %v527 = vld [vmem:[%s522 + $0x10] sm:$0xf]
    %v528 = vld [vmem:[%s522 + $0x14] sm:$0xf]
    %v529 = vld [vmem:[%s522 + $0x18] sm:$0xf]
    %v530 = vld [vmem:[%s522 + $0x1c] sm:$0xf]
    %v531 = vld [vmem:[%s522 + $0x20] sm:$0xf]
    %v532 = vld [vmem:[%s522 + $0x24] sm:$0xf]
    %v533 = vld [vmem:[%s522 + $0x28] sm:$0xf]
    %v534 = vld [vmem:[%s522 + $0x2c] sm:$0xf]
    %v535 = vld [vmem:[%s522 + $0x30] sm:$0xf]
    %v536 = vld [vmem:[%s522 + $0x34] sm:$0xf]
    %v537 = vld [vmem:[%s522 + $0x38] sm:$0xf]
    %v538 = vld [vmem:[%s522 + $0x3c] sm:$0xf]
    %s539 = scalar_lea.vmem %s2, 4
    %v540 = vld [vmem:[%s539] sm:$0x1]
    %v542 = vlaneseq
    %v543 = vshrl.u32 %v542, 7
    %v544 = vsub.s32 0, %v543
    %v545 = vrot.slane %v540, %v544
    %v563 = vunpack.c.l.b16 %v523
    %v564 = vunpack.c.l.b16 %v524
    %v565 = vunpack.c.l.b16 %v525
    %v566 = vunpack.c.l.b16 %v526
    %v567 = vunpack.c.l.b16 %v527
    %v568 = vunpack.c.l.b16 %v528
    %v569 = vunpack.c.l.b16 %v529
    %v570 = vunpack.c.l.b16 %v530
    %v571 = vunpack.c.l.b16 %v531
    %v572 = vunpack.c.l.b16 %v532
    %v573 = vunpack.c.l.b16 %v533
    %v574 = vunpack.c.l.b16 %v534
    %v575 = vunpack.c.l.b16 %v535
    %v576 = vunpack.c.l.b16 %v536
    %v577 = vunpack.c.l.b16 %v537
    %v578 = vunpack.c.l.b16 %v538
    %v579 = vpack.c.b16 %v564, %v563
    %v580 = vpack.c.b16 %v566, %v565
    %v581 = vpack.c.b16 %v568, %v567
    %v582 = vpack.c.b16 %v570, %v569
    %v583 = vpack.c.b16 %v572, %v571
    %v584 = vpack.c.b16 %v574, %v573
    %v585 = vpack.c.b16 %v576, %v575
    %v586 = vpack.c.b16 %v578, %v577
    %595 = vmatprep.subr.bf16.mxu0 0
    %596 = vmatpush1.bf16.msra.mxu0 %v579
    %597 = vmatprep.subr.bf16.mxu0 0
    %598 = vmatpush1.bf16.msra.mxu0 %v580
    %599 = vmatprep.subr.bf16.mxu0 0
    %600 = vmatpush1.bf16.msra.mxu0 %v581
    %601 = vmatprep.subr.bf16.mxu0 0
    %602 = vmatpush1.bf16.msra.mxu0 %v582
    %603 = vmatprep.subr.bf16.mxu0 0
    %604 = vmatpush1.bf16.msra.mxu0 %v583
    %605 = vmatprep.subr.bf16.mxu0 0
    %606 = vmatpush1.bf16.msra.mxu0 %v584
    %607 = vmatprep.subr.bf16.mxu0 0
    %608 = vmatpush1.bf16.msra.mxu0 %v585
    %609 = vmatprep.subr.bf16.mxu0 0
    %610 = vmatpush1.bf16.msra.mxu0 %v586
    %611 = vmatprep.subr.bf16.mxu0 0
    %612 = vmatpush1.bf16.msra.mxu0 0
    %613 = vmatprep.subr.bf16.mxu0 0
    %614 = vmatpush1.bf16.msra.mxu0 0
    %615 = vmatprep.subr.bf16.mxu0 0
    %616 = vmatpush1.bf16.msra.mxu0 0
    %617 = vmatprep.subr.bf16.mxu0 0
    %618 = vmatpush1.bf16.msra.mxu0 0
    %619 = vmatprep.subr.bf16.mxu0 0
    %620 = vmatpush1.bf16.msra.mxu0 0
    %621 = vmatprep.subr.bf16.mxu0 0
    %622 = vmatpush1.bf16.msra.mxu0 0
    %623 = vmatprep.subr.bf16.mxu0 0
    %624 = vmatpush1.bf16.msra.mxu0 0
    %625 = vmatprep.subr.bf16.mxu0 0
    %626 = vmatpush1.bf16.msra.mxu0 0
    %627 = vmatprep.mubr.bf16.mxu0 0
    %628 = vmatmul.mubr.bf16.gmra.mrb[0].mxu0 %v521
    %v629 = vpop.f32.mrb[0].mxu0
    %v630 = vadd.f32 %v545, %v629
    %v631 = vpop.f32.mrb[0].mxu0
    %v632 = vpop.f32.mrb[0].mxu0
    %v633 = vpop.f32.mrb[0].mxu0
    %634 = vdwg.mxu0
    %v635 = vmul.f32 %v630, %v630
    %v636 = vmul.f32 %v635, 0.035677407
    %v637 = vadd.f32 %v636, 0.7978846
    %v638 = vmul.f32 %v630, %v637
    %v639 = vmul.f32 %v630, 0.5
    %v640 = vtanh.pop %v638
    %v641 = vadd.f32 %v640, 1.0
    %v642 = vmul.f32 %v639, %v641
    %643 = vst [vmem:[#allocation5] sm:$0xff] %v642
    // Predicated region
    $region18: #{example_deep_nn_forward.1} parent=1 // pred_check
      _
    $region19: #{example_deep_nn_forward.1} parent=1 // pred_check_branch
      %645 = sbr.rel (0) target = $region21
    $region20: #{example_deep_nn_forward.1} parent=1 // pred_region
      %s647 = ssub.s32 128, 128
      %648 = vsyncadd [#allocation4], %s647
      %s650 = sshll.u32 [#allocation5], 4
      %s651 = int_to_ptr.vmem [resolvable:$true] %s650
      %653 = dma.vmem_to_hbm [thread:$0]  %s651, 128, %s3, [#allocation4]
    $region21: #{example_deep_nn_forward.1} parent=1 // pred_fallthru
      _
    // Predicated region
    $region22: #{example_deep_nn_forward.1} parent=1 // pred_check
      _
    $region23: #{example_deep_nn_forward.1} parent=1 // pred_check_branch
      %655 = sbr.rel (0) target = $region25
    $region24: #{example_deep_nn_forward.1} parent=1 // pred_region
      %656 = dma.done [#allocation4], 128
    $region25: #{example_deep_nn_forward.1} parent=1 // pred_fallthru
      _
    %657 = vsyncpa [#allocation3], 1
    %658 = vsyncpa [#allocation4], 1

</llo_original>
